<compile_context>
chip_gen: v5e
topology: v5e:2x2
jax: 0.10.0
libtpu: 0.0.40
codegen_flags: <defaults>
</compile_context>

<pallas_src>
import functools

import jax
import jax.numpy as jnp
from jax import lax
from jax.experimental import pallas as pl
from jax.experimental.pallas import tpu as pltpu


def _round_up(n, m):
    return ((n + m - 1) // m) * m


def critic_kernel(x_ref, w1_ref, b1_ref, w2_ref, b2_ref, out_ref, *, precision):
    """One batch tile of: Linear(S->H) -> ReLU -> Linear(H->1).

    Batch lives on the 128-lane axis of the hidden activation and the output
    (lane-dense stores); x arrives in natural [TB, S] layout and the S
    contraction happens on the MXU.

      x_ref  : [TB, S]    current batch tile (pipelined per grid step)
      w1_ref : [H, S]     layer-1 weight, PyTorch [out, in] layout (VMEM-resident)
      b1_ref : [H, 1]     layer-1 bias column, f32 (VMEM-resident)
      w2_ref : [1, H]     layer-2 weight as a lane-dense row (VMEM-resident)
      b2_ref : [1, 1]     layer-2 bias scalar (SMEM, f32)
      out_ref: [1, 1, TB] value estimates for this tile (lane-dense store)
    """
    # Layer 1 on the MXU: w1 [H,S] x x [TB,S], contracting the last dim of both
    # (A @ B^T pattern) -> h [H, TB]; f32 accumulation regardless of input dtype.
    h = lax.dot_general(
        w1_ref[...], x_ref[...],
        dimension_numbers=(((1,), (1,)), ((), ())),
        preferred_element_type=jnp.float32,
        precision=precision)                                   # [H, TB]

    # Epilogue on the VPU (irreducible minimum): bias add + ReLU, kept in f32.
    h = jnp.maximum(h + b1_ref[...], 0.0)                      # [H, TB]

    # Layer 2 on the MXU: lane-dense [1,H] row times [H,TB] -> [1,TB].
    v = jnp.dot(w2_ref[...], h.astype(w2_ref.dtype),
                preferred_element_type=jnp.float32,
                precision=precision)                           # [1, TB]
    v = v + b2_ref[0, 0]

    out_ref[0] = v.astype(out_ref.dtype)                       # lane-dense store


def critic_forward(x, w1, b1, w2, b2, *, block_b=1024, use_bf16_mxu=False):
    """Critic forward pass.

    x : [B, S] float32 (natural PyTorch layout, no host-side transpose needed)
    w1: [H, S], b1: [H], w2: [1, H], b2: [1]  (PyTorch nn.Linear layout)
    Returns v: [B, 1] float32.
    """
    B, S = x.shape
    H = w1.shape[0]

    # --- batch tile selection -------------------------------------------------
    # Tiny dispatch-bound RL case: single tile, tb == B, zero wrapper ops.
    # Throughput regime: 128-aligned lane-dense tiles; once B >= 256 cap tb so
    # there are >= 2 tiles and ("parallel",) can shard across v7x's two TCs.
    if B <= 128 and B % 8 == 0:
        tb = B
    elif B < 256:
        tb = _round_up(B, 128)
    else:
        tb = min(_round_up(block_b, 128), _round_up(-(-B // 2), 128))
    b_pad = _round_up(B, tb)
    num_tiles = b_pad // tb

    x_p = x if b_pad == B else jnp.pad(x, ((0, b_pad - B), (0, 0)))

    b1_c = b1.reshape(H, 1).astype(jnp.float32)
    w2_r = w2.reshape(1, H)
    b2_s = b2.reshape(1, 1).astype(jnp.float32)

    if use_bf16_mxu:
        # bf16 MXU inputs (half the x DMA bytes / half the vreg footprint of
        # the matmul operands); accumulation and the bias+ReLU epilogue stay
        # f32, so the same kernel is also safe on v5e (no bf16 VPU there).
        x_p = x_p.astype(jnp.bfloat16)
        w1_k = w1.astype(jnp.bfloat16)
        w2_r = w2_r.astype(jnp.bfloat16)
        precision = lax.Precision.DEFAULT
    else:
        w1_k = w1
        precision = lax.Precision.HIGHEST   # exact f32 matmul (matches PyTorch)

    flops = 2 * B * (S * H + H)
    bytes_accessed = (x_p.size * x_p.dtype.itemsize
                      + w1_k.size * w1_k.dtype.itemsize
                      + w2_r.size * w2_r.dtype.itemsize
                      + 4 * (b1.size + b2.size + b_pad))

    out = pl.pallas_call(
        functools.partial(critic_kernel, precision=precision),
        out_shape=jax.ShapeDtypeStruct((num_tiles, 1, tb), jnp.float32),
        grid_spec=pltpu.PrefetchScalarGridSpec(
            num_scalar_prefetch=0,
            grid=(num_tiles,),
            in_specs=[
                pl.BlockSpec((tb, S), lambda g: (g, 0)),   # x tile (pipelined)
                pl.BlockSpec((H, S), lambda g: (0, 0)),    # w1: VMEM-resident
                pl.BlockSpec((H, 1), lambda g: (0, 0)),    # b1: VMEM-resident
                pl.BlockSpec((1, H), lambda g: (0, 0)),    # w2 row: VMEM-resident
                pl.BlockSpec(memory_space=pltpu.MemorySpace.SMEM),  # b2 scalar
            ],
            out_specs=pl.BlockSpec((1, 1, tb), lambda g: (g, 0, 0)),
        ),
        compiler_params=pltpu.CompilerParams(
            dimension_semantics=("parallel",),   # batch tiles: megacore-shardable
            vmem_limit_bytes=32 * 1024 * 1024,
        ),
        cost_estimate=pl.CostEstimate(
            flops=flops, transcendentals=0, bytes_accessed=int(bytes_accessed)),
    )(x_p, w1_k, b1_c, w2_r, b2_s)

    # [num_tiles, 1, tb] -> [b_pad, 1] -> drop batch padding.
    return out.reshape(b_pad, 1)[:B]


def init_critic_params(key, state_dim, hidden_dim=128):
    """PyTorch nn.Linear default init (uniform +/- 1/sqrt(fan_in)),
    weights kept in PyTorch-native [out, in] layout."""
    k1, k2, k3, k4 = jax.random.split(key, 4)
    bound1 = 1.0 / jnp.sqrt(jnp.float32(state_dim))
    bound2 = 1.0 / jnp.sqrt(jnp.float32(hidden_dim))
    w1 = jax.random.uniform(k1, (hidden_dim, state_dim), jnp.float32, -bound1, bound1)
    b1 = jax.random.uniform(k2, (hidden_dim,), jnp.float32, -bound1, bound1)
    w2 = jax.random.uniform(k3, (1, hidden_dim), jnp.float32, -bound2, bound2)
    b2 = jax.random.uniform(k4, (1,), jnp.float32, -bound2, bound2)
    return w1, b1, w2, b2


def critic_ref(x, w1, b1, w2, b2):
    """Plain-JAX reference of the same Critic forward pass."""
    h = jnp.maximum(x @ w1.T + b1, 0.0)
    return h @ w2.T + b2


if __name__ == "__main__":
    STATE_DIM, HIDDEN = 4, 128     # CartPole-like: state_t_dim=4, hidden=128
    key = jax.random.PRNGKey(0)
    k_p, k_small, k_big = jax.random.split(key, 3)
    w1, b1, w2, b2 = init_critic_params(k_p, STATE_DIM, HIDDEN)

    # 1) Small dispatch-bound RL case (B=8): single tile, no wrapper pad/transpose.
    x_small = jax.random.normal(k_small, (8, STATE_DIM), dtype=jnp.float32)
    v_small = jax.block_until_ready(critic_forward(x_small, w1, b1, w2, b2))
    v_small_ref = critic_ref(x_small, w1, b1, w2, b2)
    assert v_small.shape == (8, 1), f"bad output shape {v_small.shape}"
    assert jnp.allclose(v_small, v_small_ref, atol=1e-3, rtol=1e-3), "B=8 mismatch"

    # 2) Throughput case (B=300): two 256-wide lane-dense tiles + batch padding,
    #    grid marked "parallel" (shards across the two TCs on v7x).
    x_big = jax.random.normal(k_big, (300, STATE_DIM), dtype=jnp.float32)
    v_big = jax.block_until_ready(critic_forward(x_big, w1, b1, w2, b2))
    v_big_ref = critic_ref(x_big, w1, b1, w2, b2)
    assert v_big.shape == (300, 1), f"bad output shape {v_big.shape}"
    assert jnp.allclose(v_big, v_big_ref, atol=1e-3, rtol=1e-3), "B=300 mismatch"

    # 3) bf16-MXU-input path (f32 accumulation + f32 epilogue), looser tolerance.
    v_bf = jax.block_until_ready(
        critic_forward(x_big, w1, b1, w2, b2, use_bf16_mxu=True))
    assert v_bf.shape == (300, 1), f"bad output shape {v_bf.shape}"
    assert jnp.allclose(v_bf, v_big_ref, atol=5e-2, rtol=5e-2), "bf16 mismatch"

    print("KERNEL_OK")
</pallas_src>

<mosaic_0001>
module attributes {stable_mosaic.version = 11 : i64} {
  func.func @critic_kernel(%arg0: i32, %arg1: memref<8x4xf32, #tpu.memory_space<vmem>>, %arg2: memref<128x4xf32, #tpu.memory_space<vmem>>, %arg3: memref<128x1xf32, #tpu.memory_space<vmem>>, %arg4: memref<1x128xf32, #tpu.memory_space<vmem>>, %arg5: memref<1x1xf32, #tpu.memory_space<smem>>, %arg6: memref<1x1x8xf32, #tpu.memory_space<vmem>>) attributes {dimension_semantics = [#tpu.dimension_semantics<parallel>], iteration_bounds = array<i64: 1>, scalar_prefetch = 0 : i64, scratch_operands = 0 : i64, tpu.core_type = #tpu.core_type<tc>, window_params = [{transform_indices = @transform_0, window_bounds = array<i64: 8, 4>}, {pipeline_mode = #tpu.pipeline_mode<synchronous>, transform_indices = @transform_1, window_bounds = array<i64: 128, 4>}, {pipeline_mode = #tpu.pipeline_mode<synchronous>, transform_indices = @transform_2, window_bounds = array<i64: 128, 1>}, {pipeline_mode = #tpu.pipeline_mode<synchronous>, transform_indices = @transform_3, window_bounds = array<i64: 1, 128>}, {transform_indices = @transform_4, window_bounds = array<i64: 1, 1>}, {transform_indices = @transform_5, window_bounds = array<i64: 1, 1, 8>}]} {
    %c0 = arith.constant 0 : index
    %c0_0 = arith.constant 0 : index
    %0 = vector.load %arg2[%c0, %c0_0] : memref<128x4xf32, #tpu.memory_space<vmem>>, vector<128x4xf32>
    %c0_1 = arith.constant 0 : index
    %c0_2 = arith.constant 0 : index
    %1 = vector.load %arg1[%c0_1, %c0_2] : memref<8x4xf32, #tpu.memory_space<vmem>>, vector<8x4xf32>
    %cst = arith.constant dense<0.000000e+00> : vector<128x8xf32>
    %2 = tpu.matmul %0, %1, %cst {dimension_numbers = #tpu.dot_dimension_numbers<[1], [1], [0], [0], [0, 0, 1, 0], [], []>, precision = #tpu.contract_precision<fp32>} : vector<128x4xf32>, vector<8x4xf32>, vector<128x8xf32> -> vector<128x8xf32>
    %c0_3 = arith.constant 0 : index
    %c0_4 = arith.constant 0 : index
    %3 = vector.load %arg3[%c0_3, %c0_4] : memref<128x1xf32, #tpu.memory_space<vmem>>, vector<128x1xf32>
    %4 = vector.broadcast %3 : vector<128x1xf32> to vector<128x8xf32>
    %5 = arith.addf %2, %4 : vector<128x8xf32>
    %cst_5 = arith.constant 0.000000e+00 : f32
    %6 = vector.broadcast %cst_5 : f32 to vector<128x8xf32>
    %7 = arith.maximumf %5, %6 : vector<128x8xf32>
    %c0_6 = arith.constant 0 : index
    %c0_7 = arith.constant 0 : index
    %8 = vector.load %arg4[%c0_6, %c0_7] : memref<1x128xf32, #tpu.memory_space<vmem>>, vector<1x128xf32>
    %cst_8 = arith.constant dense<0.000000e+00> : vector<1x8xf32>
    %9 = tpu.matmul %8, %7, %cst_8 {dimension_numbers = #tpu.dot_dimension_numbers<[1], [0], [0], [1], [0, 0, 1, 1], [], []>, precision = #tpu.contract_precision<fp32>} : vector<1x128xf32>, vector<128x8xf32>, vector<1x8xf32> -> vector<1x8xf32>
    %c0_9 = arith.constant 0 : index
    %c0_10 = arith.constant 0 : index
    %10 = memref.load %arg5[%c0_9, %c0_10] : memref<1x1xf32, #tpu.memory_space<smem>>
    %11 = vector.broadcast %10 : f32 to vector<1x8xf32>
    %12 = arith.addf %9, %11 : vector<1x8xf32>
    %c0_11 = arith.constant 0 : index
    %c0_12 = arith.constant 0 : index
    %c0_13 = arith.constant 0 : index
    %13 = vector.load %arg6[%c0_11, %c0_12, %c0_13] : memref<1x1x8xf32, #tpu.memory_space<vmem>>, vector<1x1x8xf32>
    %14 = vector.shape_cast %13 : vector<1x1x8xf32> to vector<1x8xf32>
    %15 = vector.shape_cast %12 : vector<1x8xf32> to vector<1x1x8xf32>
    tpu.vector_store %arg6[%c0_11, %c0_12, %c0_13], %15 {strides = array<i32>} : memref<1x1x8xf32, #tpu.memory_space<vmem>>, vector<1x1x8xf32>,
    return
  }
  func.func @transform_0(%arg0: i32) -> (i32, i32) {
    %c0_i32 = arith.constant 0 : i32
    %c0_i32_0 = arith.constant 0 : i32
    return %arg0, %c0_i32 : i32, i32
  }
  func.func @transform_1(%arg0: i32) -> (i32, i32) {
    %c0_i32 = arith.constant 0 : i32
    %c0_i32_0 = arith.constant 0 : i32
    %c0_i32_1 = arith.constant 0 : i32
    return %c0_i32, %c0_i32_0 : i32, i32
  }
  func.func @transform_2(%arg0: i32) -> (i32, i32) {
    %c0_i32 = arith.constant 0 : i32
    %c0_i32_0 = arith.constant 0 : i32
    %c0_i32_1 = arith.constant 0 : i32
    return %c0_i32, %c0_i32_0 : i32, i32
  }
  func.func @transform_3(%arg0: i32) -> (i32, i32) {
    %c0_i32 = arith.constant 0 : i32
    %c0_i32_0 = arith.constant 0 : i32
    %c0_i32_1 = arith.constant 0 : i32
    return %c0_i32, %c0_i32_0 : i32, i32
  }
  func.func @transform_4(%arg0: i32) -> (i32, i32) {
    %c0_i32 = arith.constant 0 : i32
    %c0_i32_0 = arith.constant 0 : i32
    %c0_i32_1 = arith.constant 0 : i32
    return %c0_i32, %c0_i32_0 : i32, i32
  }
  func.func @transform_5(%arg0: i32) -> (i32, i32, i32) {
    %c0_i32 = arith.constant 0 : i32
    %c0_i32_0 = arith.constant 0 : i32
    %c0_i32_1 = arith.constant 0 : i32
    return %arg0, %c0_i32, %c0_i32_0 : i32, i32, i32
  }
}

</mosaic_0001>

<llo_original>
// kernel: tpu_custom_call.1
$region0: #{tpu_custom_call.1}
  #allocation0 [shape = 'u32[]', space=smem, size = 0x4, offset = 0x4, fixed_abs, tag = 'smem constant byte address 0x4 - core index']
  #allocation1 [shape = 'u32[72,128]{1,0:T(1,128)}', space=vmem, size = 0x9000, scoped, tag = 'internal scratch']
  #allocation2 [shape = 'f32[1,1]{1,0:T(1,128)S(6)}', space=smem, size = 0x200, scoped, tag = 'scoped memory for tpu_custom_call.1']
  %s0 = inlined_call_operand.vmem [shape: f32[8,4], index: 0, kind: input, shape index: {}]
  %s1 = inlined_call_operand.vmem [shape: f32[128,4], index: 1, kind: input, shape index: {}]
  %s2 = inlined_call_operand.vmem [shape: f32[128,1], index: 2, kind: input, shape index: {}]
  %s3 = inlined_call_operand.vmem [shape: f32[1,128], index: 3, kind: input, shape index: {}]
  %s4 = inlined_call_operand.<no memory space> [shape: f32[1,1], index: 4, kind: input, shape index: {}]
  %s5 = inlined_call_operand.hbm [shape: f32[1,1,8], index: 5, kind: output, shape index: {}]
  %s6 = sld [smem:[#allocation0]]
  $region30: #{tpu_custom_call.1} parent=0
    _
  %s8 = ssub.s32 1, %s6
  %s9 = scalar_select 0, %s8, %s6
  %10 = sst [smem:[#allocation2]] %s4
  $region1: #{tpu_custom_call.1} parent=0
    #allocation3 [shape = 'u8[512]{0}', space=vmem, size = 0x400, scoped, tag = 'output window, operand 0, single buffered']
    #allocation4 [shape = 's32[1]{0}', space=sflag, size = 0x4, scoped, tag = 'scoped memory for tpu_custom_call.1']
    %11 = vsyncpa [#allocation4], 0
    // Predicated region
    $region2: #{tpu_custom_call.1} parent=1 // pred_check
      _
    $region3: #{tpu_custom_call.1} parent=1 // pred_check_branch
      %13 = sbr.rel (0) target = $region5
    $region4: #{tpu_custom_call.1} parent=1 // pred_region
      _
    $region5: #{tpu_custom_call.1} parent=1 // pred_fallthru
      _
    // Predicated region
    $region6: #{tpu_custom_call.1} parent=1 // pred_check
      _
    $region7: #{tpu_custom_call.1} parent=1 // pred_check_branch
      %15 = sbr.rel (0) target = $region9
    $region8: #{tpu_custom_call.1} parent=1 // pred_region
      _
    $region9: #{tpu_custom_call.1} parent=1 // pred_fallthru
      _
    // Predicated region
    $region10: #{tpu_custom_call.1} parent=1 // pred_check
      _
    $region11: #{tpu_custom_call.1} parent=1 // pred_check_branch
      %17 = sbr.rel (0) target = $region13
    $region12: #{tpu_custom_call.1} parent=1 // pred_region
      _
    $region13: #{tpu_custom_call.1} parent=1 // pred_fallthru
      _
    // Predicated region
    $region14: #{tpu_custom_call.1} parent=1 // pred_check
      _
    $region15: #{tpu_custom_call.1} parent=1 // pred_check_branch
      %19 = sbr.rel (0) target = $region17
    $region16: #{tpu_custom_call.1} parent=1 // pred_region
      _
    $region17: #{tpu_custom_call.1} parent=1 // pred_fallthru
      _
    // Predicated region
    $region18: #{tpu_custom_call.1} parent=1 // pred_check
      _
    $region19: #{tpu_custom_call.1} parent=1 // pred_check_branch
      %21 = sbr.rel (0) target = $region21
    $region20: #{tpu_custom_call.1} parent=1 // pred_region
      _
    $region21: #{tpu_custom_call.1} parent=1 // pred_fallthru
      _
    %v22 = vld [vmem:[%s1] sm:$0xff]
    %v23 = vld [vmem:[%s1 + $0x8] sm:$0xff]
    %v24 = vld [vmem:[%s1 + $0x10] sm:$0xff]
    %v25 = vld [vmem:[%s1 + $0x18] sm:$0xff]
    %v26 = vld [vmem:[%s1 + $0x20] sm:$0xff]
    %v27 = vld [vmem:[%s1 + $0x28] sm:$0xff]
    %v28 = vld [vmem:[%s1 + $0x30] sm:$0xff]
    %v29 = vld [vmem:[%s1 + $0x38] sm:$0xff]
    %v30 = vld [vmem:[%s1 + $0x40] sm:$0xff]
    %v31 = vld [vmem:[%s1 + $0x48] sm:$0xff]
    %v32 = vld [vmem:[%s1 + $0x50] sm:$0xff]
    %v33 = vld [vmem:[%s1 + $0x58] sm:$0xff]
    %v34 = vld [vmem:[%s1 + $0x60] sm:$0xff]
    %v35 = vld [vmem:[%s1 + $0x68] sm:$0xff]
    %v36 = vld [vmem:[%s1 + $0x70] sm:$0xff]
    %v37 = vld [vmem:[%s1 + $0x78] sm:$0xff]
    %v38 = vld [vmem:[%s0] sm:$0xff]
    %v39 = vld [vmem:[%s2] sm:$0xff]
    %v40 = vld [vmem:[%s2 + $0x8] sm:$0xff]
    %v41 = vld [vmem:[%s2 + $0x10] sm:$0xff]
    %v42 = vld [vmem:[%s2 + $0x18] sm:$0xff]
    %v43 = vld [vmem:[%s2 + $0x20] sm:$0xff]
    %v44 = vld [vmem:[%s2 + $0x28] sm:$0xff]
    %v45 = vld [vmem:[%s2 + $0x30] sm:$0xff]
    %v46 = vld [vmem:[%s2 + $0x38] sm:$0xff]
    %v47 = vld [vmem:[%s2 + $0x40] sm:$0xff]
    %v48 = vld [vmem:[%s2 + $0x48] sm:$0xff]
    %v49 = vld [vmem:[%s2 + $0x50] sm:$0xff]
    %v50 = vld [vmem:[%s2 + $0x58] sm:$0xff]
    %v51 = vld [vmem:[%s2 + $0x60] sm:$0xff]
    %v52 = vld [vmem:[%s2 + $0x68] sm:$0xff]
    %v53 = vld [vmem:[%s2 + $0x70] sm:$0xff]
    %v54 = vld [vmem:[%s2 + $0x78] sm:$0xff]
    %56 = vset.pattern.permute.xlu0 0
    %57 = vperm.xlu0 %56, %v39
    %v58 = vpop.permute.xlu0 %57
    %61 = vset.pattern.permute.xlu0 0
    %62 = vperm.xlu0 %61, %v40
    %v63 = vpop.permute.xlu0 %62
    %66 = vset.pattern.permute.xlu0 0
    %67 = vperm.xlu0 %66, %v41
    %v68 = vpop.permute.xlu0 %67
    %71 = vset.pattern.permute.xlu0 0
    %72 = vperm.xlu0 %71, %v42
    %v73 = vpop.permute.xlu0 %72
    %76 = vset.pattern.permute.xlu0 0
    %77 = vperm.xlu0 %76, %v43
    %v78 = vpop.permute.xlu0 %77
    %81 = vset.pattern.permute.xlu0 0
    %82 = vperm.xlu0 %81, %v44
    %v83 = vpop.permute.xlu0 %82
    %86 = vset.pattern.permute.xlu0 0
    %87 = vperm.xlu0 %86, %v45
    %v88 = vpop.permute.xlu0 %87
    %91 = vset.pattern.permute.xlu0 0
    %92 = vperm.xlu0 %91, %v46
    %v93 = vpop.permute.xlu0 %92
    %96 = vset.pattern.permute.xlu0 0
    %97 = vperm.xlu0 %96, %v47
    %v98 = vpop.permute.xlu0 %97
    %101 = vset.pattern.permute.xlu0 0
    %102 = vperm.xlu0 %101, %v48
    %v103 = vpop.permute.xlu0 %102
    %106 = vset.pattern.permute.xlu0 0
    %107 = vperm.xlu0 %106, %v49
    %v108 = vpop.permute.xlu0 %107
    %111 = vset.pattern.permute.xlu0 0
    %112 = vperm.xlu0 %111, %v50
    %v113 = vpop.permute.xlu0 %112
    %116 = vset.pattern.permute.xlu0 0
    %117 = vperm.xlu0 %116, %v51
    %v118 = vpop.permute.xlu0 %117
    %121 = vset.pattern.permute.xlu0 0
    %122 = vperm.xlu0 %121, %v52
    %v123 = vpop.permute.xlu0 %122
    %126 = vset.pattern.permute.xlu0 0
    %127 = vperm.xlu0 %126, %v53
    %v128 = vpop.permute.xlu0 %127
    %131 = vset.pattern.permute.xlu0 0
    %132 = vperm.xlu0 %131, %v54
    %v133 = vpop.permute.xlu0 %132
    %vm135 = vcmask 31744
    %v137 = vsel %vm135, %v22, 0
    %v140 = vsel %vm135, %v23, 0
    %v143 = vsel %vm135, %v24, 0
    %v146 = vsel %vm135, %v25, 0
    %v149 = vsel %vm135, %v26, 0
    %v152 = vsel %vm135, %v27, 0
    %v155 = vsel %vm135, %v28, 0
    %v158 = vsel %vm135, %v29, 0
    %v161 = vsel %vm135, %v30, 0
    %v164 = vsel %vm135, %v31, 0
    %v167 = vsel %vm135, %v32, 0
    %v170 = vsel %vm135, %v33, 0
    %v173 = vsel %vm135, %v34, 0
    %v176 = vsel %vm135, %v35, 0
    %v179 = vsel %vm135, %v36, 0
    %v182 = vsel %vm135, %v37, 0
    %v185 = vsel %vm135, %v38, 0
    %187 = vmatpush.xpose.msra.mxu0 0.0
    %188 = vmatpush.xpose.msra.mxu0 0.0
    %189 = vmatpush.xpose.msra.mxu0 0.0
    %190 = vmatpush.xpose.msra.mxu0 0.0
    %191 = vmatpush.xpose.msra.mxu0 0.0
    %192 = vmatpush.xpose.msra.mxu0 0.0
    %193 = vmatpush.xpose.msra.mxu0 0.0
    %194 = vmatpush.xpose.msra.mxu0 0.0
    %195 = vmatpush.xpose.msra.mxu0 0.0
    %196 = vmatpush.xpose.msra.mxu0 0.0
    %197 = vmatpush.xpose.msra.mxu0 0.0
    %198 = vmatpush.xpose.msra.mxu0 0.0
    %199 = vmatpush.xpose.msra.mxu0 0.0
    %200 = vmatpush.xpose.msra.mxu0 0.0
    %201 = vmatpush.xpose.msra.mxu0 0.0
    %v202 = vand.u32 %v185, 4294901760
    %203 = vmatpush.xpose.msra.mxu0 %v202
    %v204 = vand.u32 %v137, 4294901760
    %v205 = vsub.f32 %v137, %v204
    %v206 = vand.u32 %v205, 4294901760
    %v207 = vsub.f32 %v205, %v206
    %v208 = vand.u32 %v207, 4294901760
    %209 = vmatmul.f32.gmra.mxu0 %v208
    %v210 = vpop.f32.mrf.mxu0
    %v211 = vadd.f32 %v58, %v210
    %v212 = vand.u32 %v140, 4294901760
    %v213 = vsub.f32 %v140, %v212
    %v214 = vand.u32 %v213, 4294901760
    %v215 = vsub.f32 %v213, %v214
    %v216 = vand.u32 %v215, 4294901760
    %217 = vmatmul.f32.gmra.mxu0 %v216
    %v218 = vpop.f32.mrf.mxu0
    %v219 = vadd.f32 %v63, %v218
    %v220 = vand.u32 %v143, 4294901760
    %v221 = vsub.f32 %v143, %v220
    %v222 = vand.u32 %v221, 4294901760
    %v223 = vsub.f32 %v221, %v222
    %v224 = vand.u32 %v223, 4294901760
    %225 = vmatmul.f32.gmra.mxu0 %v224
    %v226 = vpop.f32.mrf.mxu0
    %v227 = vadd.f32 %v68, %v226
    %v228 = vand.u32 %v146, 4294901760
    %v229 = vsub.f32 %v146, %v228
    %v230 = vand.u32 %v229, 4294901760
    %v231 = vsub.f32 %v229, %v230
    %v232 = vand.u32 %v231, 4294901760
    %233 = vmatmul.f32.gmra.mxu0 %v232
    %v234 = vpop.f32.mrf.mxu0
    %v235 = vadd.f32 %v73, %v234
    %v236 = vand.u32 %v149, 4294901760
    %v237 = vsub.f32 %v149, %v236
    %v238 = vand.u32 %v237, 4294901760
    %v239 = vsub.f32 %v237, %v238
    %v240 = vand.u32 %v239, 4294901760
    %241 = vmatmul.f32.gmra.mxu0 %v240
    %v242 = vpop.f32.mrf.mxu0
    %v243 = vadd.f32 %v78, %v242
    %v244 = vand.u32 %v152, 4294901760
    %v245 = vsub.f32 %v152, %v244
    %v246 = vand.u32 %v245, 4294901760
    %v247 = vsub.f32 %v245, %v246
    %v248 = vand.u32 %v247, 4294901760
    %249 = vmatmul.f32.gmra.mxu0 %v248
    %v250 = vpop.f32.mrf.mxu0
    %v251 = vadd.f32 %v83, %v250
    %v252 = vand.u32 %v155, 4294901760
    %v253 = vsub.f32 %v155, %v252
    %v254 = vand.u32 %v253, 4294901760
    %v255 = vsub.f32 %v253, %v254
    %v256 = vand.u32 %v255, 4294901760
    %257 = vmatmul.f32.gmra.mxu0 %v256
    %v258 = vpop.f32.mrf.mxu0
    %v259 = vadd.f32 %v88, %v258
    %v260 = vand.u32 %v158, 4294901760
    %v261 = vsub.f32 %v158, %v260
    %v262 = vand.u32 %v261, 4294901760
    %v263 = vsub.f32 %v261, %v262
    %v264 = vand.u32 %v263, 4294901760
    %265 = vmatmul.f32.gmra.mxu0 %v264
    %v266 = vpop.f32.mrf.mxu0
    %v267 = vadd.f32 %v93, %v266
    %v268 = vand.u32 %v161, 4294901760
    %v269 = vsub.f32 %v161, %v268
    %v270 = vand.u32 %v269, 4294901760
    %v271 = vsub.f32 %v269, %v270
    %v272 = vand.u32 %v271, 4294901760
    %273 = vmatmul.f32.gmra.mxu0 %v272
    %v274 = vpop.f32.mrf.mxu0
    %v275 = vadd.f32 %v98, %v274
    %v276 = vand.u32 %v164, 4294901760
    %v277 = vsub.f32 %v164, %v276
    %v278 = vand.u32 %v277, 4294901760
    %v279 = vsub.f32 %v277, %v278
    %v280 = vand.u32 %v279, 4294901760
    %281 = vmatmul.f32.gmra.mxu0 %v280
    %v282 = vpop.f32.mrf.mxu0
    %v283 = vadd.f32 %v103, %v282
    %v284 = vand.u32 %v167, 4294901760
    %v285 = vsub.f32 %v167, %v284
    %v286 = vand.u32 %v285, 4294901760
    %v287 = vsub.f32 %v285, %v286
    %v288 = vand.u32 %v287, 4294901760
    %289 = vmatmul.f32.gmra.mxu0 %v288
    %v290 = vpop.f32.mrf.mxu0
    %v291 = vadd.f32 %v108, %v290
    %v292 = vand.u32 %v170, 4294901760
    %v293 = vsub.f32 %v170, %v292
    %v294 = vand.u32 %v293, 4294901760
    %v295 = vsub.f32 %v293, %v294
    %v296 = vand.u32 %v295, 4294901760
    %297 = vmatmul.f32.gmra.mxu0 %v296
    %v298 = vpop.f32.mrf.mxu0
    %v299 = vadd.f32 %v113, %v298
    %v300 = vand.u32 %v173, 4294901760
    %v301 = vsub.f32 %v173, %v300
    %v302 = vand.u32 %v301, 4294901760
    %v303 = vsub.f32 %v301, %v302
    %v304 = vand.u32 %v303, 4294901760
    %305 = vmatmul.f32.gmra.mxu0 %v304
    %v306 = vpop.f32.mrf.mxu0
    %v307 = vadd.f32 %v118, %v306
    %v308 = vand.u32 %v176, 4294901760
    %v309 = vsub.f32 %v176, %v308
    %v310 = vand.u32 %v309, 4294901760
    %v311 = vsub.f32 %v309, %v310
    %v312 = vand.u32 %v311, 4294901760
    %313 = vmatmul.f32.gmra.mxu0 %v312
    %v314 = vpop.f32.mrf.mxu0
    %v315 = vadd.f32 %v123, %v314
    %v316 = vand.u32 %v179, 4294901760
    %v317 = vsub.f32 %v179, %v316
    %v318 = vand.u32 %v317, 4294901760
    %v319 = vsub.f32 %v317, %v318
    %v320 = vand.u32 %v319, 4294901760
    %321 = vmatmul.f32.gmra.mxu0 %v320
    %v322 = vpop.f32.mrf.mxu0
    %v323 = vadd.f32 %v128, %v322
    %v324 = vand.u32 %v182, 4294901760
    %v325 = vsub.f32 %v182, %v324
    %v326 = vand.u32 %v325, 4294901760
    %v327 = vsub.f32 %v325, %v326
    %v328 = vand.u32 %v327, 4294901760
    %329 = vmatmul.f32.gmra.mxu0 %v328
    %v330 = vpop.f32.mrf.mxu0
    %v331 = vadd.f32 %v133, %v330
    %332 = vdwg.mxu0
    %333 = vmatpush.xpose.msra.mxu0 0.0
    %334 = vmatpush.xpose.msra.mxu0 0.0
    %335 = vmatpush.xpose.msra.mxu0 0.0
    %336 = vmatpush.xpose.msra.mxu0 0.0
    %337 = vmatpush.xpose.msra.mxu0 0.0
    %338 = vmatpush.xpose.msra.mxu0 0.0
    %339 = vmatpush.xpose.msra.mxu0 0.0
    %340 = vmatpush.xpose.msra.mxu0 0.0
    %341 = vmatpush.xpose.msra.mxu0 0.0
    %342 = vmatpush.xpose.msra.mxu0 0.0
    %343 = vmatpush.xpose.msra.mxu0 0.0
    %344 = vmatpush.xpose.msra.mxu0 0.0
    %345 = vmatpush.xpose.msra.mxu0 0.0
    %346 = vmatpush.xpose.msra.mxu0 0.0
    %347 = vmatpush.xpose.msra.mxu0 0.0
    %v348 = vand.u32 %v185, 4294901760
    %v349 = vsub.f32 %v185, %v348
    %v350 = vand.u32 %v349, 4294901760
    %v351 = vsub.f32 %v349, %v350
    %v352 = vand.u32 %v351, 4294901760
    %353 = vmatpush.xpose.msra.mxu0 %v352
    %v354 = vand.u32 %v137, 4294901760
    %355 = vmatmul.f32.gmra.mxu0 %v354
    %v356 = vpop.f32.mrf.mxu0
    %v357 = vadd.f32 %v211, %v356
    %v358 = vand.u32 %v140, 4294901760
    %359 = vmatmul.f32.gmra.mxu0 %v358
    %v360 = vpop.f32.mrf.mxu0
    %v361 = vadd.f32 %v219, %v360
    %v362 = vand.u32 %v143, 4294901760
    %363 = vmatmul.f32.gmra.mxu0 %v362
    %v364 = vpop.f32.mrf.mxu0
    %v365 = vadd.f32 %v227, %v364
    %v366 = vand.u32 %v146, 4294901760
    %367 = vmatmul.f32.gmra.mxu0 %v366
    %v368 = vpop.f32.mrf.mxu0
    %v369 = vadd.f32 %v235, %v368
    %v370 = vand.u32 %v149, 4294901760
    %371 = vmatmul.f32.gmra.mxu0 %v370
    %v372 = vpop.f32.mrf.mxu0
    %v373 = vadd.f32 %v243, %v372
    %v374 = vand.u32 %v152, 4294901760
    %375 = vmatmul.f32.gmra.mxu0 %v374
    %v376 = vpop.f32.mrf.mxu0
    %v377 = vadd.f32 %v251, %v376
    %v378 = vand.u32 %v155, 4294901760
    %379 = vmatmul.f32.gmra.mxu0 %v378
    %v380 = vpop.f32.mrf.mxu0
    %v381 = vadd.f32 %v259, %v380
    %v382 = vand.u32 %v158, 4294901760
    %383 = vmatmul.f32.gmra.mxu0 %v382
    %v384 = vpop.f32.mrf.mxu0
    %v385 = vadd.f32 %v267, %v384
    %v386 = vand.u32 %v161, 4294901760
    %387 = vmatmul.f32.gmra.mxu0 %v386
    %v388 = vpop.f32.mrf.mxu0
    %v389 = vadd.f32 %v275, %v388
    %v390 = vand.u32 %v164, 4294901760
    %391 = vmatmul.f32.gmra.mxu0 %v390
    %v392 = vpop.f32.mrf.mxu0
    %v393 = vadd.f32 %v283, %v392
    %v394 = vand.u32 %v167, 4294901760
    %395 = vmatmul.f32.gmra.mxu0 %v394
    %v396 = vpop.f32.mrf.mxu0
    %v397 = vadd.f32 %v291, %v396
    %v398 = vand.u32 %v170, 4294901760
    %399 = vmatmul.f32.gmra.mxu0 %v398
    %v400 = vpop.f32.mrf.mxu0
    %v401 = vadd.f32 %v299, %v400
    %v402 = vand.u32 %v173, 4294901760
    %403 = vmatmul.f32.gmra.mxu0 %v402
    %v404 = vpop.f32.mrf.mxu0
    %v405 = vadd.f32 %v307, %v404
    %v406 = vand.u32 %v176, 4294901760
    %407 = vmatmul.f32.gmra.mxu0 %v406
    %v408 = vpop.f32.mrf.mxu0
    %v409 = vadd.f32 %v315, %v408
    %v410 = vand.u32 %v179, 4294901760
    %411 = vmatmul.f32.gmra.mxu0 %v410
    %v412 = vpop.f32.mrf.mxu0
    %v413 = vadd.f32 %v323, %v412
    %v414 = vand.u32 %v182, 4294901760
    %415 = vmatmul.f32.gmra.mxu0 %v414
    %v416 = vpop.f32.mrf.mxu0
    %v417 = vadd.f32 %v331, %v416
    %418 = vdwg.mxu0
    %419 = vmatpush.xpose.msra.mxu0 0.0
    %420 = vmatpush.xpose.msra.mxu0 0.0
    %421 = vmatpush.xpose.msra.mxu0 0.0
    %422 = vmatpush.xpose.msra.mxu0 0.0
    %423 = vmatpush.xpose.msra.mxu0 0.0
    %424 = vmatpush.xpose.msra.mxu0 0.0
    %425 = vmatpush.xpose.msra.mxu0 0.0
    %426 = vmatpush.xpose.msra.mxu0 0.0
    %427 = vmatpush.xpose.msra.mxu0 0.0
    %428 = vmatpush.xpose.msra.mxu0 0.0
    %429 = vmatpush.xpose.msra.mxu0 0.0
    %430 = vmatpush.xpose.msra.mxu0 0.0
    %431 = vmatpush.xpose.msra.mxu0 0.0
    %432 = vmatpush.xpose.msra.mxu0 0.0
    %433 = vmatpush.xpose.msra.mxu0 0.0
    %v434 = vand.u32 %v185, 4294901760
    %v435 = vsub.f32 %v185, %v434
    %436 = vmatpush.xpose.msra.mxu0 %v435
    %v437 = vand.u32 %v137, 4294901760
    %v438 = vsub.f32 %v137, %v437
    %439 = vmatmul.f32.gmra.mxu0 %v438
    %v440 = vpop.f32.mrf.mxu0
    %v441 = vadd.f32 %v357, %v440
    %v442 = vand.u32 %v140, 4294901760
    %v443 = vsub.f32 %v140, %v442
    %444 = vmatmul.f32.gmra.mxu0 %v443
    %v445 = vpop.f32.mrf.mxu0
    %v446 = vadd.f32 %v361, %v445
    %v447 = vand.u32 %v143, 4294901760
    %v448 = vsub.f32 %v143, %v447
    %449 = vmatmul.f32.gmra.mxu0 %v448
    %v450 = vpop.f32.mrf.mxu0
    %v451 = vadd.f32 %v365, %v450
    %v452 = vand.u32 %v146, 4294901760
    %v453 = vsub.f32 %v146, %v452
    %454 = vmatmul.f32.gmra.mxu0 %v453
    %v455 = vpop.f32.mrf.mxu0
    %v456 = vadd.f32 %v369, %v455
    %v457 = vand.u32 %v149, 4294901760
    %v458 = vsub.f32 %v149, %v457
    %459 = vmatmul.f32.gmra.mxu0 %v458
    %v460 = vpop.f32.mrf.mxu0
    %v461 = vadd.f32 %v373, %v460
    %v462 = vand.u32 %v152, 4294901760
    %v463 = vsub.f32 %v152, %v462
    %464 = vmatmul.f32.gmra.mxu0 %v463
    %v465 = vpop.f32.mrf.mxu0
    %v466 = vadd.f32 %v377, %v465
    %v467 = vand.u32 %v155, 4294901760
    %v468 = vsub.f32 %v155, %v467
    %469 = vmatmul.f32.gmra.mxu0 %v468
    %v470 = vpop.f32.mrf.mxu0
    %v471 = vadd.f32 %v381, %v470
    %v472 = vand.u32 %v158, 4294901760
    %v473 = vsub.f32 %v158, %v472
    %474 = vmatmul.f32.gmra.mxu0 %v473
    %v475 = vpop.f32.mrf.mxu0
    %v476 = vadd.f32 %v385, %v475
    %v477 = vand.u32 %v161, 4294901760
    %v478 = vsub.f32 %v161, %v477
    %479 = vmatmul.f32.gmra.mxu0 %v478
    %v480 = vpop.f32.mrf.mxu0
    %v481 = vadd.f32 %v389, %v480
    %v482 = vand.u32 %v164, 4294901760
    %v483 = vsub.f32 %v164, %v482
    %484 = vmatmul.f32.gmra.mxu0 %v483
    %v485 = vpop.f32.mrf.mxu0
    %v486 = vadd.f32 %v393, %v485
    %v487 = vand.u32 %v167, 4294901760
    %v488 = vsub.f32 %v167, %v487
    %489 = vmatmul.f32.gmra.mxu0 %v488
    %v490 = vpop.f32.mrf.mxu0
    %v491 = vadd.f32 %v397, %v490
    %v492 = vand.u32 %v170, 4294901760
    %v493 = vsub.f32 %v170, %v492
    %494 = vmatmul.f32.gmra.mxu0 %v493
    %v495 = vpop.f32.mrf.mxu0
    %v496 = vadd.f32 %v401, %v495
    %v497 = vand.u32 %v173, 4294901760
    %v498 = vsub.f32 %v173, %v497
    %499 = vmatmul.f32.gmra.mxu0 %v498
    %v500 = vpop.f32.mrf.mxu0
    %v501 = vadd.f32 %v405, %v500
    %v502 = vand.u32 %v176, 4294901760
    %v503 = vsub.f32 %v176, %v502
    %504 = vmatmul.f32.gmra.mxu0 %v503
    %v505 = vpop.f32.mrf.mxu0
    %v506 = vadd.f32 %v409, %v505
    %v507 = vand.u32 %v179, 4294901760
    %v508 = vsub.f32 %v179, %v507
    %509 = vmatmul.f32.gmra.mxu0 %v508
    %v510 = vpop.f32.mrf.mxu0
    %v511 = vadd.f32 %v413, %v510
    %v512 = vand.u32 %v182, 4294901760
    %v513 = vsub.f32 %v182, %v512
    %514 = vmatmul.f32.gmra.mxu0 %v513
    %v515 = vpop.f32.mrf.mxu0
    %v516 = vadd.f32 %v417, %v515
    %517 = vdwg.mxu0
    %518 = vmatpush.xpose.msra.mxu0 0.0
    %519 = vmatpush.xpose.msra.mxu0 0.0
    %520 = vmatpush.xpose.msra.mxu0 0.0
    %521 = vmatpush.xpose.msra.mxu0 0.0
    %522 = vmatpush.xpose.msra.mxu0 0.0
    %523 = vmatpush.xpose.msra.mxu0 0.0
    %524 = vmatpush.xpose.msra.mxu0 0.0
    %525 = vmatpush.xpose.msra.mxu0 0.0
    %526 = vmatpush.xpose.msra.mxu0 0.0
    %527 = vmatpush.xpose.msra.mxu0 0.0
    %528 = vmatpush.xpose.msra.mxu0 0.0
    %529 = vmatpush.xpose.msra.mxu0 0.0
    %530 = vmatpush.xpose.msra.mxu0 0.0
    %531 = vmatpush.xpose.msra.mxu0 0.0
    %532 = vmatpush.xpose.msra.mxu0 0.0
    %v533 = vand.u32 %v185, 4294901760
    %534 = vmatpush.xpose.msra.mxu0 %v533
    %v535 = vand.u32 %v137, 4294901760
    %v536 = vsub.f32 %v137, %v535
    %v537 = vand.u32 %v536, 4294901760
    %538 = vmatmul.f32.gmra.mxu0 %v537
    %v539 = vpop.f32.mrf.mxu0
    %v540 = vadd.f32 %v441, %v539
    %v541 = vand.u32 %v140, 4294901760
    %v542 = vsub.f32 %v140, %v541
    %v543 = vand.u32 %v542, 4294901760
    %544 = vmatmul.f32.gmra.mxu0 %v543
    %v545 = vpop.f32.mrf.mxu0
    %v546 = vadd.f32 %v446, %v545
    %v547 = vand.u32 %v143, 4294901760
    %v548 = vsub.f32 %v143, %v547
    %v549 = vand.u32 %v548, 4294901760
    %550 = vmatmul.f32.gmra.mxu0 %v549
    %v551 = vpop.f32.mrf.mxu0
    %v552 = vadd.f32 %v451, %v551
    %v553 = vand.u32 %v146, 4294901760
    %v554 = vsub.f32 %v146, %v553
    %v555 = vand.u32 %v554, 4294901760
    %556 = vmatmul.f32.gmra.mxu0 %v555
    %v557 = vpop.f32.mrf.mxu0
    %v558 = vadd.f32 %v456, %v557
    %v559 = vand.u32 %v149, 4294901760
    %v560 = vsub.f32 %v149, %v559
    %v561 = vand.u32 %v560, 4294901760
    %562 = vmatmul.f32.gmra.mxu0 %v561
    %v563 = vpop.f32.mrf.mxu0
    %v564 = vadd.f32 %v461, %v563
    %v565 = vand.u32 %v152, 4294901760
    %v566 = vsub.f32 %v152, %v565
    %v567 = vand.u32 %v566, 4294901760
    %568 = vmatmul.f32.gmra.mxu0 %v567
    %v569 = vpop.f32.mrf.mxu0
    %v570 = vadd.f32 %v466, %v569
    %v571 = vand.u32 %v155, 4294901760
    %v572 = vsub.f32 %v155, %v571
    %v573 = vand.u32 %v572, 4294901760
    %574 = vmatmul.f32.gmra.mxu0 %v573
    %v575 = vpop.f32.mrf.mxu0
    %v576 = vadd.f32 %v471, %v575
    %v577 = vand.u32 %v158, 4294901760
    %v578 = vsub.f32 %v158, %v577
    %v579 = vand.u32 %v578, 4294901760
    %580 = vmatmul.f32.gmra.mxu0 %v579
    %v581 = vpop.f32.mrf.mxu0
    %v582 = vadd.f32 %v476, %v581
    %v583 = vand.u32 %v161, 4294901760
    %v584 = vsub.f32 %v161, %v583
    %v585 = vand.u32 %v584, 4294901760
    %586 = vmatmul.f32.gmra.mxu0 %v585
    %v587 = vpop.f32.mrf.mxu0
    %v588 = vadd.f32 %v481, %v587
    %v589 = vand.u32 %v164, 4294901760
    %v590 = vsub.f32 %v164, %v589
    %v591 = vand.u32 %v590, 4294901760
    %592 = vmatmul.f32.gmra.mxu0 %v591
    %v593 = vpop.f32.mrf.mxu0
    %v594 = vadd.f32 %v486, %v593
    %v595 = vand.u32 %v167, 4294901760
    %v596 = vsub.f32 %v167, %v595
    %v597 = vand.u32 %v596, 4294901760
    %598 = vmatmul.f32.gmra.mxu0 %v597
    %v599 = vpop.f32.mrf.mxu0
    %v600 = vadd.f32 %v491, %v599
    %v601 = vand.u32 %v170, 4294901760
    %v602 = vsub.f32 %v170, %v601
    %v603 = vand.u32 %v602, 4294901760
    %604 = vmatmul.f32.gmra.mxu0 %v603
    %v605 = vpop.f32.mrf.mxu0
    %v606 = vadd.f32 %v496, %v605
    %v607 = vand.u32 %v173, 4294901760
    %v608 = vsub.f32 %v173, %v607
    %v609 = vand.u32 %v608, 4294901760
    %610 = vmatmul.f32.gmra.mxu0 %v609
    %v611 = vpop.f32.mrf.mxu0
    %v612 = vadd.f32 %v501, %v611
    %v613 = vand.u32 %v176, 4294901760
    %v614 = vsub.f32 %v176, %v613
    %v615 = vand.u32 %v614, 4294901760
    %616 = vmatmul.f32.gmra.mxu0 %v615
    %v617 = vpop.f32.mrf.mxu0
    %v618 = vadd.f32 %v506, %v617
    %v619 = vand.u32 %v179, 4294901760
    %v620 = vsub.f32 %v179, %v619
    %v621 = vand.u32 %v620, 4294901760
    %622 = vmatmul.f32.gmra.mxu0 %v621
    %v623 = vpop.f32.mrf.mxu0
    %v624 = vadd.f32 %v511, %v623
    %v625 = vand.u32 %v182, 4294901760
    %v626 = vsub.f32 %v182, %v625
    %v627 = vand.u32 %v626, 4294901760
    %628 = vmatmul.f32.gmra.mxu0 %v627
    %v629 = vpop.f32.mrf.mxu0
    %v630 = vadd.f32 %v516, %v629
    %631 = vdwg.mxu0
    %632 = vmatpush.xpose.msra.mxu0 0.0
    %633 = vmatpush.xpose.msra.mxu0 0.0
    %634 = vmatpush.xpose.msra.mxu0 0.0
    %635 = vmatpush.xpose.msra.mxu0 0.0
    %636 = vmatpush.xpose.msra.mxu0 0.0
    %637 = vmatpush.xpose.msra.mxu0 0.0
    %638 = vmatpush.xpose.msra.mxu0 0.0
    %639 = vmatpush.xpose.msra.mxu0 0.0
    %640 = vmatpush.xpose.msra.mxu0 0.0
    %641 = vmatpush.xpose.msra.mxu0 0.0
    %642 = vmatpush.xpose.msra.mxu0 0.0
    %643 = vmatpush.xpose.msra.mxu0 0.0
    %644 = vmatpush.xpose.msra.mxu0 0.0
    %645 = vmatpush.xpose.msra.mxu0 0.0
    %646 = vmatpush.xpose.msra.mxu0 0.0
    %v647 = vand.u32 %v185, 4294901760
    %v648 = vsub.f32 %v185, %v647
    %v649 = vand.u32 %v648, 4294901760
    %650 = vmatpush.xpose.msra.mxu0 %v649
    %v651 = vand.u32 %v137, 4294901760
    %652 = vmatmul.f32.gmra.mxu0 %v651
    %v653 = vpop.f32.mrf.mxu0
    %v654 = vadd.f32 %v540, %v653
    %v655 = vand.u32 %v140, 4294901760
    %656 = vmatmul.f32.gmra.mxu0 %v655
    %v657 = vpop.f32.mrf.mxu0
    %v658 = vadd.f32 %v546, %v657
    %v659 = vand.u32 %v143, 4294901760
    %660 = vmatmul.f32.gmra.mxu0 %v659
    %v661 = vpop.f32.mrf.mxu0
    %v662 = vadd.f32 %v552, %v661
    %v663 = vand.u32 %v146, 4294901760
    %664 = vmatmul.f32.gmra.mxu0 %v663
    %v665 = vpop.f32.mrf.mxu0
    %v666 = vadd.f32 %v558, %v665
    %v667 = vand.u32 %v149, 4294901760
    %668 = vmatmul.f32.gmra.mxu0 %v667
    %v669 = vpop.f32.mrf.mxu0
    %v670 = vadd.f32 %v564, %v669
    %v671 = vand.u32 %v152, 4294901760
    %672 = vmatmul.f32.gmra.mxu0 %v671
    %v673 = vpop.f32.mrf.mxu0
    %v674 = vadd.f32 %v570, %v673
    %v675 = vand.u32 %v155, 4294901760
    %676 = vmatmul.f32.gmra.mxu0 %v675
    %v677 = vpop.f32.mrf.mxu0
    %v678 = vadd.f32 %v576, %v677
    %v679 = vand.u32 %v158, 4294901760
    %680 = vmatmul.f32.gmra.mxu0 %v679
    %v681 = vpop.f32.mrf.mxu0
    %v682 = vadd.f32 %v582, %v681
    %v683 = vand.u32 %v161, 4294901760
    %684 = vmatmul.f32.gmra.mxu0 %v683
    %v685 = vpop.f32.mrf.mxu0
    %v686 = vadd.f32 %v588, %v685
    %v687 = vand.u32 %v164, 4294901760
    %688 = vmatmul.f32.gmra.mxu0 %v687
    %v689 = vpop.f32.mrf.mxu0
    %v690 = vadd.f32 %v594, %v689
    %v691 = vand.u32 %v167, 4294901760
    %692 = vmatmul.f32.gmra.mxu0 %v691
    %v693 = vpop.f32.mrf.mxu0
    %v694 = vadd.f32 %v600, %v693
    %v695 = vand.u32 %v170, 4294901760
    %696 = vmatmul.f32.gmra.mxu0 %v695
    %v697 = vpop.f32.mrf.mxu0
    %v698 = vadd.f32 %v606, %v697
    %v699 = vand.u32 %v173, 4294901760
    %700 = vmatmul.f32.gmra.mxu0 %v699
    %v701 = vpop.f32.mrf.mxu0
    %v702 = vadd.f32 %v612, %v701
    %v703 = vand.u32 %v176, 4294901760
    %704 = vmatmul.f32.gmra.mxu0 %v703
    %v705 = vpop.f32.mrf.mxu0
    %v706 = vadd.f32 %v618, %v705
    %v707 = vand.u32 %v179, 4294901760
    %708 = vmatmul.f32.gmra.mxu0 %v707
    %v709 = vpop.f32.mrf.mxu0
    %v710 = vadd.f32 %v624, %v709
    %v711 = vand.u32 %v182, 4294901760
    %712 = vmatmul.f32.gmra.mxu0 %v711
    %v713 = vpop.f32.mrf.mxu0
    %v714 = vadd.f32 %v630, %v713
    %715 = vdwg.mxu0
    %716 = vmatpush.xpose.msra.mxu0 0.0
    %717 = vmatpush.xpose.msra.mxu0 0.0
    %718 = vmatpush.xpose.msra.mxu0 0.0
    %719 = vmatpush.xpose.msra.mxu0 0.0
    %720 = vmatpush.xpose.msra.mxu0 0.0
    %721 = vmatpush.xpose.msra.mxu0 0.0
    %722 = vmatpush.xpose.msra.mxu0 0.0
    %723 = vmatpush.xpose.msra.mxu0 0.0
    %724 = vmatpush.xpose.msra.mxu0 0.0
    %725 = vmatpush.xpose.msra.mxu0 0.0
    %726 = vmatpush.xpose.msra.mxu0 0.0
    %727 = vmatpush.xpose.msra.mxu0 0.0
    %728 = vmatpush.xpose.msra.mxu0 0.0
    %729 = vmatpush.xpose.msra.mxu0 0.0
    %730 = vmatpush.xpose.msra.mxu0 0.0
    %v731 = vand.u32 %v185, 4294901760
    %732 = vmatpush.xpose.msra.mxu0 %v731
    %v733 = vand.u32 %v137, 4294901760
    %734 = vmatmul.f32.gmra.mxu0 %v733
    %v735 = vpop.f32.mrf.mxu0
    %v736 = vadd.f32 %v654, %v735
    %v737 = vand.u32 %v140, 4294901760
    %738 = vmatmul.f32.gmra.mxu0 %v737
    %v739 = vpop.f32.mrf.mxu0
    %v740 = vadd.f32 %v658, %v739
    %v741 = vand.u32 %v143, 4294901760
    %742 = vmatmul.f32.gmra.mxu0 %v741
    %v743 = vpop.f32.mrf.mxu0
    %v744 = vadd.f32 %v662, %v743
    %v745 = vand.u32 %v146, 4294901760
    %746 = vmatmul.f32.gmra.mxu0 %v745
    %v747 = vpop.f32.mrf.mxu0
    %v748 = vadd.f32 %v666, %v747
    %v749 = vand.u32 %v149, 4294901760
    %750 = vmatmul.f32.gmra.mxu0 %v749
    %v751 = vpop.f32.mrf.mxu0
    %v752 = vadd.f32 %v670, %v751
    %v753 = vand.u32 %v152, 4294901760
    %754 = vmatmul.f32.gmra.mxu0 %v753
    %v755 = vpop.f32.mrf.mxu0
    %v756 = vadd.f32 %v674, %v755
    %v757 = vand.u32 %v155, 4294901760
    %758 = vmatmul.f32.gmra.mxu0 %v757
    %v759 = vpop.f32.mrf.mxu0
    %v760 = vadd.f32 %v678, %v759
    %v761 = vand.u32 %v158, 4294901760
    %762 = vmatmul.f32.gmra.mxu0 %v761
    %v763 = vpop.f32.mrf.mxu0
    %v764 = vadd.f32 %v682, %v763
    %v765 = vand.u32 %v161, 4294901760
    %766 = vmatmul.f32.gmra.mxu0 %v765
    %v767 = vpop.f32.mrf.mxu0
    %v768 = vadd.f32 %v686, %v767
    %v769 = vand.u32 %v164, 4294901760
    %770 = vmatmul.f32.gmra.mxu0 %v769
    %v771 = vpop.f32.mrf.mxu0
    %v772 = vadd.f32 %v690, %v771
    %v773 = vand.u32 %v167, 4294901760
    %774 = vmatmul.f32.gmra.mxu0 %v773
    %v775 = vpop.f32.mrf.mxu0
    %v776 = vadd.f32 %v694, %v775
    %v777 = vand.u32 %v170, 4294901760
    %778 = vmatmul.f32.gmra.mxu0 %v777
    %v779 = vpop.f32.mrf.mxu0
    %v780 = vadd.f32 %v698, %v779
    %v781 = vand.u32 %v173, 4294901760
    %782 = vmatmul.f32.gmra.mxu0 %v781
    %v783 = vpop.f32.mrf.mxu0
    %v784 = vadd.f32 %v702, %v783
    %v785 = vand.u32 %v176, 4294901760
    %786 = vmatmul.f32.gmra.mxu0 %v785
    %v787 = vpop.f32.mrf.mxu0
    %v788 = vadd.f32 %v706, %v787
    %v789 = vand.u32 %v179, 4294901760
    %790 = vmatmul.f32.gmra.mxu0 %v789
    %v791 = vpop.f32.mrf.mxu0
    %v792 = vadd.f32 %v710, %v791
    %v793 = vand.u32 %v182, 4294901760
    %794 = vmatmul.f32.gmra.mxu0 %v793
    %v795 = vpop.f32.mrf.mxu0
    %v796 = vadd.f32 %v714, %v795
    %797 = vdwg.mxu0
    %v798 = vmax.f32 %v736, 0.0
    %v799 = vmax.f32 %v740, 0.0
    %v800 = vmax.f32 %v744, 0.0
    %v801 = vmax.f32 %v748, 0.0
    %v802 = vmax.f32 %v752, 0.0
    %v803 = vmax.f32 %v756, 0.0
    %v804 = vmax.f32 %v760, 0.0
    %v805 = vmax.f32 %v764, 0.0
    %v806 = vmax.f32 %v768, 0.0
    %v807 = vmax.f32 %v772, 0.0
    %v808 = vmax.f32 %v776, 0.0
    %v809 = vmax.f32 %v780, 0.0
    %v810 = vmax.f32 %v784, 0.0
    %v811 = vmax.f32 %v788, 0.0
    %v812 = vmax.f32 %v792, 0.0
    %v813 = vmax.f32 %v796, 0.0
    %v814 = vld [vmem:[%s3] sm:$0x1]
    %s815 = sld [smem:[#allocation2]]
    %v816 = vstv %s815
    %v817 = vand.u32 %v813, 4294901760
    %818 = vmatpush.msra.mxu0 %v817
    %v819 = vand.u32 %v812, 4294901760
    %820 = vmatpush.msra.mxu0 %v819
    %v821 = vand.u32 %v811, 4294901760
    %822 = vmatpush.msra.mxu0 %v821
    %v823 = vand.u32 %v810, 4294901760
    %824 = vmatpush.msra.mxu0 %v823
    %v825 = vand.u32 %v809, 4294901760
    %826 = vmatpush.msra.mxu0 %v825
    %v827 = vand.u32 %v808, 4294901760
    %828 = vmatpush.msra.mxu0 %v827
    %v829 = vand.u32 %v807, 4294901760
    %830 = vmatpush.msra.mxu0 %v829
    %v831 = vand.u32 %v806, 4294901760
    %832 = vmatpush.msra.mxu0 %v831
    %v833 = vand.u32 %v805, 4294901760
    %834 = vmatpush.msra.mxu0 %v833
    %v835 = vand.u32 %v804, 4294901760
    %836 = vmatpush.msra.mxu0 %v835
    %v837 = vand.u32 %v803, 4294901760
    %838 = vmatpush.msra.mxu0 %v837
    %v839 = vand.u32 %v802, 4294901760
    %840 = vmatpush.msra.mxu0 %v839
    %v841 = vand.u32 %v801, 4294901760
    %842 = vmatpush.msra.mxu0 %v841
    %v843 = vand.u32 %v800, 4294901760
    %844 = vmatpush.msra.mxu0 %v843
    %v845 = vand.u32 %v799, 4294901760
    %846 = vmatpush.msra.mxu0 %v845
    %v847 = vand.u32 %v798, 4294901760
    %848 = vmatpush.msra.mxu0 %v847
    %v849 = vand.u32 %v814, 4294901760
    %v850 = vsub.f32 %v814, %v849
    %v851 = vand.u32 %v850, 4294901760
    %v852 = vsub.f32 %v850, %v851
    %v853 = vand.u32 %v852, 4294901760
    %854 = vmatmul.f32.gmra.mxu0 %v853
    %v855 = vpop.f32.mrf.mxu0
    %v856 = vadd.f32 %v816, %v855
    %857 = vdwg.mxu0
    %v858 = vand.u32 %v813, 4294901760
    %v859 = vsub.f32 %v813, %v858
    %v860 = vand.u32 %v859, 4294901760
    %v861 = vsub.f32 %v859, %v860
    %v862 = vand.u32 %v861, 4294901760
    %863 = vmatpush.msra.mxu0 %v862
    %v864 = vand.u32 %v812, 4294901760
    %v865 = vsub.f32 %v812, %v864
    %v866 = vand.u32 %v865, 4294901760
    %v867 = vsub.f32 %v865, %v866
    %v868 = vand.u32 %v867, 4294901760
    %869 = vmatpush.msra.mxu0 %v868
    %v870 = vand.u32 %v811, 4294901760
    %v871 = vsub.f32 %v811, %v870
    %v872 = vand.u32 %v871, 4294901760
    %v873 = vsub.f32 %v871, %v872
    %v874 = vand.u32 %v873, 4294901760
    %875 = vmatpush.msra.mxu0 %v874
    %v876 = vand.u32 %v810, 4294901760
    %v877 = vsub.f32 %v810, %v876
    %v878 = vand.u32 %v877, 4294901760
    %v879 = vsub.f32 %v877, %v878
    %v880 = vand.u32 %v879, 4294901760
    %881 = vmatpush.msra.mxu0 %v880
    %v882 = vand.u32 %v809, 4294901760
    %v883 = vsub.f32 %v809, %v882
    %v884 = vand.u32 %v883, 4294901760
    %v885 = vsub.f32 %v883, %v884
    %v886 = vand.u32 %v885, 4294901760
    %887 = vmatpush.msra.mxu0 %v886
    %v888 = vand.u32 %v808, 4294901760
    %v889 = vsub.f32 %v808, %v888
    %v890 = vand.u32 %v889, 4294901760
    %v891 = vsub.f32 %v889, %v890
    %v892 = vand.u32 %v891, 4294901760
    %893 = vmatpush.msra.mxu0 %v892
    %v894 = vand.u32 %v807, 4294901760
    %v895 = vsub.f32 %v807, %v894
    %v896 = vand.u32 %v895, 4294901760
    %v897 = vsub.f32 %v895, %v896
    %v898 = vand.u32 %v897, 4294901760
    %899 = vmatpush.msra.mxu0 %v898
    %v900 = vand.u32 %v806, 4294901760
    %v901 = vsub.f32 %v806, %v900
    %v902 = vand.u32 %v901, 4294901760
    %v903 = vsub.f32 %v901, %v902
    %v904 = vand.u32 %v903, 4294901760
    %905 = vmatpush.msra.mxu0 %v904
    %v906 = vand.u32 %v805, 4294901760
    %v907 = vsub.f32 %v805, %v906
    %v908 = vand.u32 %v907, 4294901760
    %v909 = vsub.f32 %v907, %v908
    %v910 = vand.u32 %v909, 4294901760
    %911 = vmatpush.msra.mxu0 %v910
    %v912 = vand.u32 %v804, 4294901760
    %v913 = vsub.f32 %v804, %v912
    %v914 = vand.u32 %v913, 4294901760
    %v915 = vsub.f32 %v913, %v914
    %v916 = vand.u32 %v915, 4294901760
    %917 = vmatpush.msra.mxu0 %v916
    %v918 = vand.u32 %v803, 4294901760
    %v919 = vsub.f32 %v803, %v918
    %v920 = vand.u32 %v919, 4294901760
    %v921 = vsub.f32 %v919, %v920
    %v922 = vand.u32 %v921, 4294901760
    %923 = vmatpush.msra.mxu0 %v922
    %v924 = vand.u32 %v802, 4294901760
    %v925 = vsub.f32 %v802, %v924
    %v926 = vand.u32 %v925, 4294901760
    %v927 = vsub.f32 %v925, %v926
    %v928 = vand.u32 %v927, 4294901760
    %929 = vmatpush.msra.mxu0 %v928
    %v930 = vand.u32 %v801, 4294901760
    %v931 = vsub.f32 %v801, %v930
    %v932 = vand.u32 %v931, 4294901760
    %v933 = vsub.f32 %v931, %v932
    %v934 = vand.u32 %v933, 4294901760
    %935 = vmatpush.msra.mxu0 %v934
    %v936 = vand.u32 %v800, 4294901760
    %v937 = vsub.f32 %v800, %v936
    %v938 = vand.u32 %v937, 4294901760
    %v939 = vsub.f32 %v937, %v938
    %v940 = vand.u32 %v939, 4294901760
    %941 = vmatpush.msra.mxu0 %v940
    %v942 = vand.u32 %v799, 4294901760
    %v943 = vsub.f32 %v799, %v942
    %v944 = vand.u32 %v943, 4294901760
    %v945 = vsub.f32 %v943, %v944
    %v946 = vand.u32 %v945, 4294901760
    %947 = vmatpush.msra.mxu0 %v946
    %v948 = vand.u32 %v798, 4294901760
    %v949 = vsub.f32 %v798, %v948
    %v950 = vand.u32 %v949, 4294901760
    %v951 = vsub.f32 %v949, %v950
    %v952 = vand.u32 %v951, 4294901760
    %953 = vmatpush.msra.mxu0 %v952
    %v954 = vand.u32 %v814, 4294901760
    %955 = vmatmul.f32.gmra.mxu0 %v954
    %v956 = vpop.f32.mrf.mxu0
    %v957 = vadd.f32 %v856, %v956
    %958 = vdwg.mxu0
    %v959 = vand.u32 %v813, 4294901760
    %v960 = vsub.f32 %v813, %v959
    %961 = vmatpush.msra.mxu0 %v960
    %v962 = vand.u32 %v812, 4294901760
    %v963 = vsub.f32 %v812, %v962
    %964 = vmatpush.msra.mxu0 %v963
    %v965 = vand.u32 %v811, 4294901760
    %v966 = vsub.f32 %v811, %v965
    %967 = vmatpush.msra.mxu0 %v966
    %v968 = vand.u32 %v810, 4294901760
    %v969 = vsub.f32 %v810, %v968
    %970 = vmatpush.msra.mxu0 %v969
    %v971 = vand.u32 %v809, 4294901760
    %v972 = vsub.f32 %v809, %v971
    %973 = vmatpush.msra.mxu0 %v972
    %v974 = vand.u32 %v808, 4294901760
    %v975 = vsub.f32 %v808, %v974
    %976 = vmatpush.msra.mxu0 %v975
    %v977 = vand.u32 %v807, 4294901760
    %v978 = vsub.f32 %v807, %v977
    %979 = vmatpush.msra.mxu0 %v978
    %v980 = vand.u32 %v806, 4294901760
    %v981 = vsub.f32 %v806, %v980
    %982 = vmatpush.msra.mxu0 %v981
    %v983 = vand.u32 %v805, 4294901760
    %v984 = vsub.f32 %v805, %v983
    %985 = vmatpush.msra.mxu0 %v984
    %v986 = vand.u32 %v804, 4294901760
    %v987 = vsub.f32 %v804, %v986
    %988 = vmatpush.msra.mxu0 %v987
    %v989 = vand.u32 %v803, 4294901760
    %v990 = vsub.f32 %v803, %v989
    %991 = vmatpush.msra.mxu0 %v990
    %v992 = vand.u32 %v802, 4294901760
    %v993 = vsub.f32 %v802, %v992
    %994 = vmatpush.msra.mxu0 %v993
    %v995 = vand.u32 %v801, 4294901760
    %v996 = vsub.f32 %v801, %v995
    %997 = vmatpush.msra.mxu0 %v996
    %v998 = vand.u32 %v800, 4294901760
    %v999 = vsub.f32 %v800, %v998
    %1000 = vmatpush.msra.mxu0 %v999
    %v1001 = vand.u32 %v799, 4294901760
    %v1002 = vsub.f32 %v799, %v1001
    %1003 = vmatpush.msra.mxu0 %v1002
    %v1004 = vand.u32 %v798, 4294901760
    %v1005 = vsub.f32 %v798, %v1004
    %1006 = vmatpush.msra.mxu0 %v1005
    %v1007 = vand.u32 %v814, 4294901760
    %v1008 = vsub.f32 %v814, %v1007
    %1009 = vmatmul.f32.gmra.mxu0 %v1008
    %v1010 = vpop.f32.mrf.mxu0
    %v1011 = vadd.f32 %v957, %v1010
    %1012 = vdwg.mxu0
    %v1013 = vand.u32 %v813, 4294901760
    %1014 = vmatpush.msra.mxu0 %v1013
    %v1015 = vand.u32 %v812, 4294901760
    %1016 = vmatpush.msra.mxu0 %v1015
    %v1017 = vand.u32 %v811, 4294901760
    %1018 = vmatpush.msra.mxu0 %v1017
    %v1019 = vand.u32 %v810, 4294901760
    %1020 = vmatpush.msra.mxu0 %v1019
    %v1021 = vand.u32 %v809, 4294901760
    %1022 = vmatpush.msra.mxu0 %v1021
    %v1023 = vand.u32 %v808, 4294901760
    %1024 = vmatpush.msra.mxu0 %v1023
    %v1025 = vand.u32 %v807, 4294901760
    %1026 = vmatpush.msra.mxu0 %v1025
    %v1027 = vand.u32 %v806, 4294901760
    %1028 = vmatpush.msra.mxu0 %v1027
    %v1029 = vand.u32 %v805, 4294901760
    %1030 = vmatpush.msra.mxu0 %v1029
    %v1031 = vand.u32 %v804, 4294901760
    %1032 = vmatpush.msra.mxu0 %v1031
    %v1033 = vand.u32 %v803, 4294901760
    %1034 = vmatpush.msra.mxu0 %v1033
    %v1035 = vand.u32 %v802, 4294901760
    %1036 = vmatpush.msra.mxu0 %v1035
    %v1037 = vand.u32 %v801, 4294901760
    %1038 = vmatpush.msra.mxu0 %v1037
    %v1039 = vand.u32 %v800, 4294901760
    %1040 = vmatpush.msra.mxu0 %v1039
    %v1041 = vand.u32 %v799, 4294901760
    %1042 = vmatpush.msra.mxu0 %v1041
    %v1043 = vand.u32 %v798, 4294901760
    %1044 = vmatpush.msra.mxu0 %v1043
    %v1045 = vand.u32 %v814, 4294901760
    %v1046 = vsub.f32 %v814, %v1045
    %v1047 = vand.u32 %v1046, 4294901760
    %1048 = vmatmul.f32.gmra.mxu0 %v1047
    %v1049 = vpop.f32.mrf.mxu0
    %v1050 = vadd.f32 %v1011, %v1049
    %1051 = vdwg.mxu0
    %v1052 = vand.u32 %v813, 4294901760
    %v1053 = vsub.f32 %v813, %v1052
    %v1054 = vand.u32 %v1053, 4294901760
    %1055 = vmatpush.msra.mxu0 %v1054
    %v1056 = vand.u32 %v812, 4294901760
    %v1057 = vsub.f32 %v812, %v1056
    %v1058 = vand.u32 %v1057, 4294901760
    %1059 = vmatpush.msra.mxu0 %v1058
    %v1060 = vand.u32 %v811, 4294901760
    %v1061 = vsub.f32 %v811, %v1060
    %v1062 = vand.u32 %v1061, 4294901760
    %1063 = vmatpush.msra.mxu0 %v1062
    %v1064 = vand.u32 %v810, 4294901760
    %v1065 = vsub.f32 %v810, %v1064
    %v1066 = vand.u32 %v1065, 4294901760
    %1067 = vmatpush.msra.mxu0 %v1066
    %v1068 = vand.u32 %v809, 4294901760
    %v1069 = vsub.f32 %v809, %v1068
    %v1070 = vand.u32 %v1069, 4294901760
    %1071 = vmatpush.msra.mxu0 %v1070
    %v1072 = vand.u32 %v808, 4294901760
    %v1073 = vsub.f32 %v808, %v1072
    %v1074 = vand.u32 %v1073, 4294901760
    %1075 = vmatpush.msra.mxu0 %v1074
    %v1076 = vand.u32 %v807, 4294901760
    %v1077 = vsub.f32 %v807, %v1076
    %v1078 = vand.u32 %v1077, 4294901760
    %1079 = vmatpush.msra.mxu0 %v1078
    %v1080 = vand.u32 %v806, 4294901760
    %v1081 = vsub.f32 %v806, %v1080
    %v1082 = vand.u32 %v1081, 4294901760
    %1083 = vmatpush.msra.mxu0 %v1082
    %v1084 = vand.u32 %v805, 4294901760
    %v1085 = vsub.f32 %v805, %v1084
    %v1086 = vand.u32 %v1085, 4294901760
    %1087 = vmatpush.msra.mxu0 %v1086
    %v1088 = vand.u32 %v804, 4294901760
    %v1089 = vsub.f32 %v804, %v1088
    %v1090 = vand.u32 %v1089, 4294901760
    %1091 = vmatpush.msra.mxu0 %v1090
    %v1092 = vand.u32 %v803, 4294901760
    %v1093 = vsub.f32 %v803, %v1092
    %v1094 = vand.u32 %v1093, 4294901760
    %1095 = vmatpush.msra.mxu0 %v1094
    %v1096 = vand.u32 %v802, 4294901760
    %v1097 = vsub.f32 %v802, %v1096
    %v1098 = vand.u32 %v1097, 4294901760
    %1099 = vmatpush.msra.mxu0 %v1098
    %v1100 = vand.u32 %v801, 4294901760
    %v1101 = vsub.f32 %v801, %v1100
    %v1102 = vand.u32 %v1101, 4294901760
    %1103 = vmatpush.msra.mxu0 %v1102
    %v1104 = vand.u32 %v800, 4294901760
    %v1105 = vsub.f32 %v800, %v1104
    %v1106 = vand.u32 %v1105, 4294901760
    %1107 = vmatpush.msra.mxu0 %v1106
    %v1108 = vand.u32 %v799, 4294901760
    %v1109 = vsub.f32 %v799, %v1108
    %v1110 = vand.u32 %v1109, 4294901760
    %1111 = vmatpush.msra.mxu0 %v1110
    %v1112 = vand.u32 %v798, 4294901760
    %v1113 = vsub.f32 %v798, %v1112
    %v1114 = vand.u32 %v1113, 4294901760
    %1115 = vmatpush.msra.mxu0 %v1114
    %v1116 = vand.u32 %v814, 4294901760
    %1117 = vmatmul.f32.gmra.mxu0 %v1116
    %v1118 = vpop.f32.mrf.mxu0
    %v1119 = vadd.f32 %v1050, %v1118
    %1120 = vdwg.mxu0
    %v1121 = vand.u32 %v813, 4294901760
    %1122 = vmatpush.msra.mxu0 %v1121
    %v1123 = vand.u32 %v812, 4294901760
    %1124 = vmatpush.msra.mxu0 %v1123
    %v1125 = vand.u32 %v811, 4294901760
    %1126 = vmatpush.msra.mxu0 %v1125
    %v1127 = vand.u32 %v810, 4294901760
    %1128 = vmatpush.msra.mxu0 %v1127
    %v1129 = vand.u32 %v809, 4294901760
    %1130 = vmatpush.msra.mxu0 %v1129
    %v1131 = vand.u32 %v808, 4294901760
    %1132 = vmatpush.msra.mxu0 %v1131
    %v1133 = vand.u32 %v807, 4294901760
    %1134 = vmatpush.msra.mxu0 %v1133
    %v1135 = vand.u32 %v806, 4294901760
    %1136 = vmatpush.msra.mxu0 %v1135
    %v1137 = vand.u32 %v805, 4294901760
    %1138 = vmatpush.msra.mxu0 %v1137
    %v1139 = vand.u32 %v804, 4294901760
    %1140 = vmatpush.msra.mxu0 %v1139
    %v1141 = vand.u32 %v803, 4294901760
    %1142 = vmatpush.msra.mxu0 %v1141
    %v1143 = vand.u32 %v802, 4294901760
    %1144 = vmatpush.msra.mxu0 %v1143
    %v1145 = vand.u32 %v801, 4294901760
    %1146 = vmatpush.msra.mxu0 %v1145
    %v1147 = vand.u32 %v800, 4294901760
    %1148 = vmatpush.msra.mxu0 %v1147
    %v1149 = vand.u32 %v799, 4294901760
    %1150 = vmatpush.msra.mxu0 %v1149
    %v1151 = vand.u32 %v798, 4294901760
    %1152 = vmatpush.msra.mxu0 %v1151
    %v1153 = vand.u32 %v814, 4294901760
    %1154 = vmatmul.f32.gmra.mxu0 %v1153
    %v1155 = vpop.f32.mrf.mxu0
    %v1156 = vadd.f32 %v1119, %v1155
    %1157 = vdwg.mxu0
    %vm1158 = vcmask 57344
    %1159 = vst.msk [vmem:[#allocation3] sm:$0x1] %vm1158, %v1156
    // Predicated region
    $region22: #{tpu_custom_call.1} parent=1 // pred_check
      _
    $region23: #{tpu_custom_call.1} parent=1 // pred_check_branch
      %1161 = sbr.rel (0) target = $region25
    $region24: #{tpu_custom_call.1} parent=1 // pred_region
      %1163 = vsyncadd [#allocation4], 0
      %s1165 = sshll.u32 [#allocation3], 4
      %s1166 = int_to_ptr.vmem [resolvable:$true] %s1165
      %s1167 = sshll.u32 %s5, 4
      %s1168 = int_to_ptr.hbm [resolvable:$true] %s1167
      %1170 = dma.vmem_to_hbm [thread:$0]  %s1166, 16, %s1168, [#allocation4]
    $region25: #{tpu_custom_call.1} parent=1 // pred_fallthru
      _
    // Predicated region
    $region26: #{tpu_custom_call.1} parent=1 // pred_check
      _
    $region27: #{tpu_custom_call.1} parent=1 // pred_check_branch
      %1172 = sbr.rel (0) target = $region29
    $region28: #{tpu_custom_call.1} parent=1 // pred_region
      %1174 = dma.done [#allocation4], 16
    $region29: #{tpu_custom_call.1} parent=1 // pred_fallthru
      _
    %1175 = vsyncpa [#allocation4], 1

</llo_original>
